<compile_context>
chip_gen: v5e
topology: v5e:2x2
jax: 0.10.0
libtpu: 0.0.40
codegen_flags: <defaults>
</compile_context>

<pallas_src>
import jax
import jax.numpy as jnp
from jax.experimental import pallas as pl
from jax.experimental.pallas import tpu as pltpu


def _round_up(x, m):
    return ((x + m - 1) // m) * m


def mlp_kernel(x_ref, w1_ref, b1_ref, w2_ref, b2_ref, o_ref):
    # fc1: MXU matmul with f32 accumulation; bias + ReLU on the VPU in f32.
    h = jnp.dot(x_ref[...], w1_ref[...], preferred_element_type=jnp.float32)
    h = jnp.maximum(h + b1_ref[...], 0.0)
    # fc2: cast activations to the weight dtype (bf16 weights -> bf16 matmul),
    # accumulate in f32, add bias, store lane-dense.
    y = jnp.dot(h.astype(w2_ref.dtype), w2_ref[...],
                preferred_element_type=jnp.float32)
    o_ref[...] = (y + b2_ref[...]).astype(o_ref.dtype)


def neuralnet_forward(x, w1, b1, w2, b2, *, tile_n=512, use_bf16=False):
    """x: (N, in_size) -> (N, out_size). Weights already in (in, out) layout."""
    n, in_size = x.shape
    hidden = w1.shape[1]
    out_size = w2.shape[1]

    # ---- pad hidden -> multiple of 256 (lane-aligned fc1 out / fc2 K dim) ----
    hid_p = max(256, _round_up(hidden, 128))
    # ---- pad output -> multiple of 128 (lane-dense stores) ----
    out_p = _round_up(out_size, 128)

    w1p = jnp.pad(w1, ((0, 0), (0, hid_p - hidden)))
    b1p = jnp.pad(b1, ((0, 0), (0, hid_p - hidden)))
    w2p = jnp.pad(w2, ((0, hid_p - hidden), (0, out_p - out_size)))
    b2p = jnp.pad(b2, ((0, 0), (0, out_p - out_size)))

    # ---- batch tiling: tile rows, pad N up to a tile multiple ----
    tile = min(tile_n, _round_up(n, 8))
    n_p = _round_up(n, tile)
    x_p = jnp.pad(x, ((0, n_p - n), (0, 0)))

    if use_bf16:
        # bf16 matmul operands (v6e/v7x MXU-native); biases/accumulators stay f32.
        x_p = x_p.astype(jnp.bfloat16)
        w1p = w1p.astype(jnp.bfloat16)
        w2p = w2p.astype(jnp.bfloat16)

    grid = (n_p // tile,)

    in_specs = [
        pl.BlockSpec((tile, in_size), lambda i: (i, 0)),      # x: streamed per tile
        pl.BlockSpec((in_size, hid_p), lambda i: (0, 0)),     # w1: VMEM-resident
        pl.BlockSpec((1, hid_p), lambda i: (0, 0)),           # b1: VMEM-resident
        pl.BlockSpec((hid_p, out_p), lambda i: (0, 0)),       # w2: VMEM-resident
        pl.BlockSpec((1, out_p), lambda i: (0, 0)),           # b2: VMEM-resident
    ]
    out_specs = pl.BlockSpec((tile, out_p), lambda i: (i, 0))

    bytes_accessed = (
        x_p.size * x_p.dtype.itemsize
        + w1p.size * w1p.dtype.itemsize
        + b1p.size * b1p.dtype.itemsize
        + w2p.size * w2p.dtype.itemsize
        + b2p.size * b2p.dtype.itemsize
        + n_p * out_p * 4
    )
    cost = pl.CostEstimate(
        flops=2 * n_p * (in_size * hid_p + hid_p * out_p),
        transcendentals=0,
        bytes_accessed=bytes_accessed,
    )

    y_p = pl.pallas_call(
        mlp_kernel,
        out_shape=jax.ShapeDtypeStruct((n_p, out_p), jnp.float32),
        grid=grid,
        in_specs=in_specs,
        out_specs=out_specs,
        compiler_params=pltpu.CompilerParams(
            dimension_semantics=("parallel",),
        ),
        cost_estimate=cost,
    )(x_p, w1p, b1p, w2p, b2p)

    return y_p[:n, :out_size]


def init_params(key, in_size, hidden, out_size):
    """Deterministic init mimicking torch.nn.Linear default U[-1/sqrt(fan_in), +1/sqrt(fan_in)]."""
    k1, k2, k3, k4 = jax.random.split(key, 4)
    bound1 = 1.0 / jnp.sqrt(in_size)
    bound2 = 1.0 / jnp.sqrt(hidden)
    w1 = jax.random.uniform(k1, (in_size, hidden), jnp.float32, -bound1, bound1)
    b1 = jax.random.uniform(k2, (1, hidden), jnp.float32, -bound1, bound1)
    w2 = jax.random.uniform(k3, (hidden, out_size), jnp.float32, -bound2, bound2)
    b2 = jax.random.uniform(k4, (1, out_size), jnp.float32, -bound2, bound2)
    return w1, b1, w2, b2


if __name__ == "__main__":
    # Small shapes consistent with the module's forward: x is (N, in_size).
    N, IN_SIZE, HIDDEN, OUT_SIZE = 8, 32, 200, 4

    key = jax.random.PRNGKey(0)
    kx, kp = jax.random.split(key)
    x = jax.random.normal(kx, (N, IN_SIZE), jnp.float32)
    w1, b1, w2, b2 = init_params(kp, IN_SIZE, HIDDEN, OUT_SIZE)

    # Reference in plain JAX (same semantics as the PyTorch forward).
    h_ref = jnp.maximum(x @ w1 + b1, 0.0)
    y_ref = h_ref @ w2 + b2

    # f32 path: tight tolerance.
    y = neuralnet_forward(x, w1, b1, w2, b2)
    jax.block_until_ready(y)
    assert y.shape == (N, OUT_SIZE)
    assert jnp.allclose(y, y_ref, atol=1e-5, rtol=1e-5)

    # bf16 matmul-operand path (v6e/v7x): loose tolerance (f32 accumulation).
    y_bf16 = neuralnet_forward(x, w1, b1, w2, b2, use_bf16=True)
    jax.block_until_ready(y_bf16)
    assert y_bf16.shape == (N, OUT_SIZE)
    assert jnp.allclose(y_bf16, y_ref, atol=5e-2, rtol=5e-2)

    print("KERNEL_OK")
</pallas_src>

<mosaic_0001>
module attributes {stable_mosaic.version = 11 : i64} {
  func.func @mlp_kernel(%arg0: i32, %arg1: memref<8x32xf32, #tpu.memory_space<vmem>>, %arg2: memref<32x256xf32, #tpu.memory_space<vmem>>, %arg3: memref<1x256xf32, #tpu.memory_space<vmem>>, %arg4: memref<256x128xf32, #tpu.memory_space<vmem>>, %arg5: memref<1x128xf32, #tpu.memory_space<vmem>>, %arg6: memref<8x128xf32, #tpu.memory_space<vmem>>) attributes {dimension_semantics = [#tpu.dimension_semantics<parallel>], iteration_bounds = array<i64: 1>, scalar_prefetch = 0 : i64, scratch_operands = 0 : i64, tpu.core_type = #tpu.core_type<tc>, window_params = [{transform_indices = @transform_0, window_bounds = array<i64: 8, 32>}, {pipeline_mode = #tpu.pipeline_mode<synchronous>, transform_indices = @transform_1, window_bounds = array<i64: 32, 256>}, {pipeline_mode = #tpu.pipeline_mode<synchronous>, transform_indices = @transform_2, window_bounds = array<i64: 1, 256>}, {pipeline_mode = #tpu.pipeline_mode<synchronous>, transform_indices = @transform_3, window_bounds = array<i64: 256, 128>}, {pipeline_mode = #tpu.pipeline_mode<synchronous>, transform_indices = @transform_4, window_bounds = array<i64: 1, 128>}, {transform_indices = @transform_5, window_bounds = array<i64: 8, 128>}]} {
    %c0 = arith.constant 0 : index
    %c0_0 = arith.constant 0 : index
    %0 = vector.load %arg1[%c0, %c0_0] : memref<8x32xf32, #tpu.memory_space<vmem>>, vector<8x32xf32>
    %c0_1 = arith.constant 0 : index
    %c0_2 = arith.constant 0 : index
    %1 = vector.load %arg2[%c0_1, %c0_2] : memref<32x256xf32, #tpu.memory_space<vmem>>, vector<32x256xf32>
    %cst = arith.constant dense<0.000000e+00> : vector<8x256xf32>
    %2 = tpu.matmul %0, %1, %cst {dimension_numbers = #tpu.dot_dimension_numbers<[1], [0], [0], [1], [0, 0, 1, 1], [], []>} : vector<8x32xf32>, vector<32x256xf32>, vector<8x256xf32> -> vector<8x256xf32>
    %c0_3 = arith.constant 0 : index
    %c0_4 = arith.constant 0 : index
    %3 = vector.load %arg3[%c0_3, %c0_4] : memref<1x256xf32, #tpu.memory_space<vmem>>, vector<1x256xf32>
    %4 = vector.broadcast %3 : vector<1x256xf32> to vector<8x256xf32>
    %5 = arith.addf %2, %4 : vector<8x256xf32>
    %cst_5 = arith.constant 0.000000e+00 : f32
    %6 = vector.broadcast %cst_5 : f32 to vector<8x256xf32>
    %7 = arith.maximumf %5, %6 : vector<8x256xf32>
    %c0_6 = arith.constant 0 : index
    %c0_7 = arith.constant 0 : index
    %8 = vector.load %arg4[%c0_6, %c0_7] : memref<256x128xf32, #tpu.memory_space<vmem>>, vector<256x128xf32>
    %cst_8 = arith.constant dense<0.000000e+00> : vector<8x128xf32>
    %9 = tpu.matmul %7, %8, %cst_8 {dimension_numbers = #tpu.dot_dimension_numbers<[1], [0], [0], [1], [0, 0, 1, 1], [], []>} : vector<8x256xf32>, vector<256x128xf32>, vector<8x128xf32> -> vector<8x128xf32>
    %c0_9 = arith.constant 0 : index
    %c0_10 = arith.constant 0 : index
    %10 = vector.load %arg5[%c0_9, %c0_10] : memref<1x128xf32, #tpu.memory_space<vmem>>, vector<1x128xf32>
    %11 = vector.broadcast %10 : vector<1x128xf32> to vector<8x128xf32>
    %12 = arith.addf %9, %11 : vector<8x128xf32>
    %c0_11 = arith.constant 0 : index
    %c0_12 = arith.constant 0 : index
    %13 = vector.load %arg6[%c0_11, %c0_12] : memref<8x128xf32, #tpu.memory_space<vmem>>, vector<8x128xf32>
    tpu.vector_store %arg6[%c0_11, %c0_12], %12 {strides = array<i32>} : memref<8x128xf32, #tpu.memory_space<vmem>>, vector<8x128xf32>,
    return
  }
  func.func @transform_0(%arg0: i32) -> (i32, i32) {
    %c0_i32 = arith.constant 0 : i32
    %c0_i32_0 = arith.constant 0 : i32
    return %arg0, %c0_i32 : i32, i32
  }
  func.func @transform_1(%arg0: i32) -> (i32, i32) {
    %c0_i32 = arith.constant 0 : i32
    %c0_i32_0 = arith.constant 0 : i32
    %c0_i32_1 = arith.constant 0 : i32
    return %c0_i32, %c0_i32_0 : i32, i32
  }
  func.func @transform_2(%arg0: i32) -> (i32, i32) {
    %c0_i32 = arith.constant 0 : i32
    %c0_i32_0 = arith.constant 0 : i32
    %c0_i32_1 = arith.constant 0 : i32
    return %c0_i32, %c0_i32_0 : i32, i32
  }
  func.func @transform_3(%arg0: i32) -> (i32, i32) {
    %c0_i32 = arith.constant 0 : i32
    %c0_i32_0 = arith.constant 0 : i32
    %c0_i32_1 = arith.constant 0 : i32
    return %c0_i32, %c0_i32_0 : i32, i32
  }
  func.func @transform_4(%arg0: i32) -> (i32, i32) {
    %c0_i32 = arith.constant 0 : i32
    %c0_i32_0 = arith.constant 0 : i32
    %c0_i32_1 = arith.constant 0 : i32
    return %c0_i32, %c0_i32_0 : i32, i32
  }
  func.func @transform_5(%arg0: i32) -> (i32, i32) {
    %c0_i32 = arith.constant 0 : i32
    %c0_i32_0 = arith.constant 0 : i32
    return %arg0, %c0_i32 : i32, i32
  }
}

</mosaic_0001>

<llo_original>
// kernel: tpu_custom_call.1
$region0: #{tpu_custom_call.1}
  #allocation0 [shape = 'u32[]', space=smem, size = 0x4, offset = 0x4, fixed_abs, tag = 'smem constant byte address 0x4 - core index']
  #allocation1 [shape = 'u32[72,128]{1,0:T(1,128)}', space=vmem, size = 0x9000, scoped, tag = 'internal scratch']
  %s0 = inlined_call_operand.hbm [shape: f32[8,32], index: 0, kind: input, shape index: {}]
  %s1 = inlined_call_operand.hbm [shape: f32[32,256], index: 1, kind: input, shape index: {}]
  %s2 = inlined_call_operand.hbm [shape: f32[1,256], index: 2, kind: input, shape index: {}]
  %s3 = inlined_call_operand.hbm [shape: f32[256,128], index: 3, kind: input, shape index: {}]
  %s4 = inlined_call_operand.vmem [shape: f32[1,128], index: 4, kind: input, shape index: {}]
  %s5 = inlined_call_operand.hbm [shape: f32[8,128], index: 5, kind: output, shape index: {}]
  %s6 = sld [smem:[#allocation0]]
  $region46: #{tpu_custom_call.1} parent=0
    _
  %s8 = ssub.s32 1, %s6
  %s9 = scalar_select 0, %s8, %s6
  $region1: #{tpu_custom_call.1} parent=0
    #allocation2 [shape = 'u8[4096]{0}', space=vmem, size = 0x1000, scoped, tag = 'input window, operand 0, single buffered']
    #allocation3 [shape = 's32[1]{0}', space=sflag, size = 0x4, scoped, tag = 'scoped memory for tpu_custom_call.1']
    #allocation4 [shape = 's32[1]{0}', space=sflag, size = 0x4, scoped, tag = 'scoped memory for tpu_custom_call.1']
    #allocation5 [shape = 'u8[32768]{0}', space=vmem, size = 0x8000, scoped, tag = 'input window, operand 1, single buffered']
    #allocation6 [shape = 's32[1]{0}', space=sflag, size = 0x4, scoped, tag = 'scoped memory for tpu_custom_call.1']
    #allocation7 [shape = 'u8[1024]{0}', space=vmem, size = 0x400, scoped, tag = 'input window, operand 2, single buffered']
    #allocation8 [shape = 'u8[131072]{0}', space=vmem, size = 0x20000, scoped, tag = 'input window, operand 3, single buffered']
    #allocation9 [shape = 's32[1]{0}', space=sflag, size = 0x4, scoped, tag = 'scoped memory for tpu_custom_call.1']
    #allocation10 [shape = 'u8[4096]{0}', space=vmem, size = 0x1000, scoped, tag = 'output window, operand 0, single buffered']
    %10 = vsyncpa [#allocation3], 0
    %11 = vsyncpa [#allocation6], 0
    %12 = vsyncpa [#allocation9], 0
    %13 = vsyncpa [#allocation4], 0
    // Predicated region
    $region2: #{tpu_custom_call.1} parent=1 // pred_check
      _
    $region3: #{tpu_custom_call.1} parent=1 // pred_check_branch
      %15 = sbr.rel (0) target = $region5
    $region4: #{tpu_custom_call.1} parent=1 // pred_region
      %17 = vsyncadd [#allocation3], 0
      %s19 = sshll.u32 %s0, 4
      %s20 = int_to_ptr.hbm [resolvable:$true] %s19
      %s21 = sshll.u32 [#allocation2], 4
      %s22 = int_to_ptr.vmem [resolvable:$true] %s21
      %24 = dma.hbm_to_vmem [thread:$0]  %s20, 128, %s22, [#allocation3]
    $region5: #{tpu_custom_call.1} parent=1 // pred_fallthru
      _
    // Predicated region
    $region6: #{tpu_custom_call.1} parent=1 // pred_check
      _
    $region7: #{tpu_custom_call.1} parent=1 // pred_check_branch
      %26 = sbr.rel (0) target = $region9
    $region8: #{tpu_custom_call.1} parent=1 // pred_region
      %28 = vsyncadd [#allocation6], 0
      %s29 = sshll.u32 %s1, 4
      %s30 = int_to_ptr.hbm [resolvable:$true] %s29
      %s31 = sshll.u32 [#allocation5], 4
      %s32 = int_to_ptr.vmem [resolvable:$true] %s31
      %37 = dma.hbm_to_vmem [thread:$0]  %s30, 1024, %s32, [#allocation6], 256, 256, 16
    $region9: #{tpu_custom_call.1} parent=1 // pred_fallthru
      _
    // Predicated region
    $region10: #{tpu_custom_call.1} parent=1 // pred_check
      _
    $region11: #{tpu_custom_call.1} parent=1 // pred_check_branch
      %39 = sbr.rel (0) target = $region13
    $region12: #{tpu_custom_call.1} parent=1 // pred_region
      %41 = vsyncadd [#allocation6], 0
      %s43 = sshll.u32 %s2, 4
      %s44 = int_to_ptr.hbm [resolvable:$true] %s43
      %s45 = sshll.u32 [#allocation7], 4
      %s46 = int_to_ptr.vmem [resolvable:$true] %s45
      %48 = dma.hbm_to_vmem [thread:$0]  %s44, 32, %s46, [#allocation6]
    $region13: #{tpu_custom_call.1} parent=1 // pred_fallthru
      _
    // Predicated region
    $region14: #{tpu_custom_call.1} parent=1 // pred_check
      _
    $region15: #{tpu_custom_call.1} parent=1 // pred_check_branch
      %50 = sbr.rel (0) target = $region17
    $region16: #{tpu_custom_call.1} parent=1 // pred_region
      %52 = vsyncadd [#allocation9], 0
      %s53 = sshll.u32 %s3, 4
      %s54 = int_to_ptr.hbm [resolvable:$true] %s53
      %s55 = sshll.u32 [#allocation8], 4
      %s56 = int_to_ptr.vmem [resolvable:$true] %s55
      %61 = dma.hbm_to_vmem [thread:$0]  %s54, 4096, %s56, [#allocation9], 128, 128, 8
    $region17: #{tpu_custom_call.1} parent=1 // pred_fallthru
      _
    // Predicated region
    $region18: #{tpu_custom_call.1} parent=1 // pred_check
      _
    $region19: #{tpu_custom_call.1} parent=1 // pred_check_branch
      %63 = sbr.rel (0) target = $region21
    $region20: #{tpu_custom_call.1} parent=1 // pred_region
      _
    $region21: #{tpu_custom_call.1} parent=1 // pred_fallthru
      _
    // Predicated region
    $region22: #{tpu_custom_call.1} parent=1 // pred_check
      _
    $region23: #{tpu_custom_call.1} parent=1 // pred_check_branch
      %65 = sbr.rel (0) target = $region25
    $region24: #{tpu_custom_call.1} parent=1 // pred_region
      %67 = dma.done [#allocation3], 128
    $region25: #{tpu_custom_call.1} parent=1 // pred_fallthru
      _
    // Predicated region
    $region26: #{tpu_custom_call.1} parent=1 // pred_check
      _
    $region27: #{tpu_custom_call.1} parent=1 // pred_check_branch
      %69 = sbr.rel (0) target = $region29
    $region28: #{tpu_custom_call.1} parent=1 // pred_region
      %71 = dma.done [#allocation6], 1024
    $region29: #{tpu_custom_call.1} parent=1 // pred_fallthru
      _
    // Predicated region
    $region30: #{tpu_custom_call.1} parent=1 // pred_check
      _
    $region31: #{tpu_custom_call.1} parent=1 // pred_check_branch
      %73 = sbr.rel (0) target = $region33
    $region32: #{tpu_custom_call.1} parent=1 // pred_region
      %75 = dma.done [#allocation6], 32
    $region33: #{tpu_custom_call.1} parent=1 // pred_fallthru
      _
    // Predicated region
    $region34: #{tpu_custom_call.1} parent=1 // pred_check
      _
    $region35: #{tpu_custom_call.1} parent=1 // pred_check_branch
      %77 = sbr.rel (0) target = $region37
    $region36: #{tpu_custom_call.1} parent=1 // pred_region
      %79 = dma.done [#allocation9], 4096
    $region37: #{tpu_custom_call.1} parent=1 // pred_fallthru
      _
    %v80 = vld [vmem:[#allocation2] sm:$0xff]
    %v81 = vld [vmem:[#allocation5] sm:$0xff]
    %v82 = vld [vmem:[#allocation5 + $0x8] sm:$0xff]
    %v83 = vld [vmem:[#allocation5 + $0x10] sm:$0xff]
    %v84 = vld [vmem:[#allocation5 + $0x18] sm:$0xff]
    %v85 = vld [vmem:[#allocation5 + $0x20] sm:$0xff]
    %v86 = vld [vmem:[#allocation5 + $0x28] sm:$0xff]
    %v87 = vld [vmem:[#allocation5 + $0x30] sm:$0xff]
    %v88 = vld [vmem:[#allocation5 + $0x38] sm:$0xff]
    %v89 = vld [vmem:[#allocation7] sm:$0x3]
    %v91 = vperm.slane %v89, 0
    %v92 = vperm.slane %v89, 1
    %vm95 = vcmask 261120
    %v97 = vsel %vm95, %v80, 0
    %99 = vmatpush.msra.mxu0 0.0
    %100 = vmatpush.msra.mxu0 0.0
    %101 = vmatpush.msra.mxu0 0.0
    %102 = vmatpush.msra.mxu0 0.0
    %103 = vmatpush.msra.mxu0 0.0
    %104 = vmatpush.msra.mxu0 0.0
    %105 = vmatpush.msra.mxu0 0.0
    %106 = vmatpush.msra.mxu0 0.0
    %107 = vmatpush.msra.mxu0 0.0
    %108 = vmatpush.msra.mxu0 0.0
    %109 = vmatpush.msra.mxu0 0.0
    %110 = vmatpush.msra.mxu0 0.0
    %111 = vmatpush.msra.mxu0 %v87
    %112 = vmatpush.msra.mxu0 %v85
    %113 = vmatpush.msra.mxu0 %v83
    %114 = vmatpush.msra.mxu0 %v81
    %115 = vmatmul.f32.gmra.mxu0 %v97
    %v116 = vpop.f32.mrf.mxu0
    %v117 = vadd.f32 %v91, %v116
    %118 = vdwg.mxu0
    %119 = vmatpush.msra.mxu0 0.0
    %120 = vmatpush.msra.mxu0 0.0
    %121 = vmatpush.msra.mxu0 0.0
    %122 = vmatpush.msra.mxu0 0.0
    %123 = vmatpush.msra.mxu0 0.0
    %124 = vmatpush.msra.mxu0 0.0
    %125 = vmatpush.msra.mxu0 0.0
    %126 = vmatpush.msra.mxu0 0.0
    %127 = vmatpush.msra.mxu0 0.0
    %128 = vmatpush.msra.mxu0 0.0
    %129 = vmatpush.msra.mxu0 0.0
    %130 = vmatpush.msra.mxu0 0.0
    %131 = vmatpush.msra.mxu0 %v88
    %132 = vmatpush.msra.mxu0 %v86
    %133 = vmatpush.msra.mxu0 %v84
    %134 = vmatpush.msra.mxu0 %v82
    %135 = vmatmul.f32.gmra.mxu0 %v97
    %v136 = vpop.f32.mrf.mxu0
    %v137 = vadd.f32 %v92, %v136
    %138 = vdwg.mxu0
    %v139 = vmax.f32 %v117, 0.0
    %v140 = vmax.f32 %v137, 0.0
    %v141 = vld [vmem:[#allocation8] sm:$0xff]
    %v142 = vld [vmem:[#allocation8 + $0x8] sm:$0xff]
    %v143 = vld [vmem:[#allocation8 + $0x10] sm:$0xff]
    %v144 = vld [vmem:[#allocation8 + $0x18] sm:$0xff]
    %v145 = vld [vmem:[#allocation8 + $0x20] sm:$0xff]
    %v146 = vld [vmem:[#allocation8 + $0x28] sm:$0xff]
    %v147 = vld [vmem:[#allocation8 + $0x30] sm:$0xff]
    %v148 = vld [vmem:[#allocation8 + $0x38] sm:$0xff]
    %v149 = vld [vmem:[#allocation8 + $0x40] sm:$0xff]
    %v150 = vld [vmem:[#allocation8 + $0x48] sm:$0xff]
    %v151 = vld [vmem:[#allocation8 + $0x50] sm:$0xff]
    %v152 = vld [vmem:[#allocation8 + $0x58] sm:$0xff]
    %v153 = vld [vmem:[#allocation8 + $0x60] sm:$0xff]
    %v154 = vld [vmem:[#allocation8 + $0x68] sm:$0xff]
    %v155 = vld [vmem:[#allocation8 + $0x70] sm:$0xff]
    %v156 = vld [vmem:[#allocation8 + $0x78] sm:$0xff]
    %v157 = vld [vmem:[#allocation8 + $0x80] sm:$0xff]
    %v158 = vld [vmem:[#allocation8 + $0x88] sm:$0xff]
    %v159 = vld [vmem:[#allocation8 + $0x90] sm:$0xff]
    %v160 = vld [vmem:[#allocation8 + $0x98] sm:$0xff]
    %v161 = vld [vmem:[#allocation8 + $0xa0] sm:$0xff]
    %v162 = vld [vmem:[#allocation8 + $0xa8] sm:$0xff]
    %v163 = vld [vmem:[#allocation8 + $0xb0] sm:$0xff]
    %v164 = vld [vmem:[#allocation8 + $0xb8] sm:$0xff]
    %v165 = vld [vmem:[#allocation8 + $0xc0] sm:$0xff]
    %v166 = vld [vmem:[#allocation8 + $0xc8] sm:$0xff]
    %v167 = vld [vmem:[#allocation8 + $0xd0] sm:$0xff]
    %v168 = vld [vmem:[#allocation8 + $0xd8] sm:$0xff]
    %v169 = vld [vmem:[#allocation8 + $0xe0] sm:$0xff]
    %v170 = vld [vmem:[#allocation8 + $0xe8] sm:$0xff]
    %v171 = vld [vmem:[#allocation8 + $0xf0] sm:$0xff]
    %v172 = vld [vmem:[#allocation8 + $0xf8] sm:$0xff]
    %v173 = vld [vmem:[%s4] sm:$0x1]
    %v175 = vperm.slane %v173, 0
    %177 = vmatpush.msra.mxu0 %v156
    %178 = vmatpush.msra.mxu0 %v155
    %179 = vmatpush.msra.mxu0 %v154
    %180 = vmatpush.msra.mxu0 %v153
    %181 = vmatpush.msra.mxu0 %v152
    %182 = vmatpush.msra.mxu0 %v151
    %183 = vmatpush.msra.mxu0 %v150
    %184 = vmatpush.msra.mxu0 %v149
    %185 = vmatpush.msra.mxu0 %v148
    %186 = vmatpush.msra.mxu0 %v147
    %187 = vmatpush.msra.mxu0 %v146
    %188 = vmatpush.msra.mxu0 %v145
    %189 = vmatpush.msra.mxu0 %v144
    %190 = vmatpush.msra.mxu0 %v143
    %191 = vmatpush.msra.mxu0 %v142
    %192 = vmatpush.msra.mxu0 %v141
    %193 = vmatmul.f32.gmra.mxu0 %v139
    %v194 = vpop.f32.mrf.mxu0
    %v195 = vadd.f32 %v175, %v194
    %196 = vdwg.mxu0
    %197 = vmatpush.msra.mxu0 %v172
    %198 = vmatpush.msra.mxu0 %v171
    %199 = vmatpush.msra.mxu0 %v170
    %200 = vmatpush.msra.mxu0 %v169
    %201 = vmatpush.msra.mxu0 %v168
    %202 = vmatpush.msra.mxu0 %v167
    %203 = vmatpush.msra.mxu0 %v166
    %204 = vmatpush.msra.mxu0 %v165
    %205 = vmatpush.msra.mxu0 %v164
    %206 = vmatpush.msra.mxu0 %v163
    %207 = vmatpush.msra.mxu0 %v162
    %208 = vmatpush.msra.mxu0 %v161
    %209 = vmatpush.msra.mxu0 %v160
    %210 = vmatpush.msra.mxu0 %v159
    %211 = vmatpush.msra.mxu0 %v158
    %212 = vmatpush.msra.mxu0 %v157
    %213 = vmatmul.f32.gmra.mxu0 %v140
    %v214 = vpop.f32.mrf.mxu0
    %v215 = vadd.f32 %v195, %v214
    %216 = vdwg.mxu0
    %217 = vst [vmem:[#allocation10] sm:$0xff] %v215
    // Predicated region
    $region38: #{tpu_custom_call.1} parent=1 // pred_check
      _
    $region39: #{tpu_custom_call.1} parent=1 // pred_check_branch
      %219 = sbr.rel (0) target = $region41
    $region40: #{tpu_custom_call.1} parent=1 // pred_region
      %221 = vsyncadd [#allocation4], 0
      %s223 = sshll.u32 [#allocation10], 4
      %s224 = int_to_ptr.vmem [resolvable:$true] %s223
      %s225 = sshll.u32 %s5, 4
      %s226 = int_to_ptr.hbm [resolvable:$true] %s225
      %228 = dma.vmem_to_hbm [thread:$0]  %s224, 128, %s226, [#allocation4]
    $region41: #{tpu_custom_call.1} parent=1 // pred_fallthru
      _
    // Predicated region
    $region42: #{tpu_custom_call.1} parent=1 // pred_check
      _
    $region43: #{tpu_custom_call.1} parent=1 // pred_check_branch
      %230 = sbr.rel (0) target = $region45
    $region44: #{tpu_custom_call.1} parent=1 // pred_region
      %232 = dma.done [#allocation4], 128
    $region45: #{tpu_custom_call.1} parent=1 // pred_fallthru
      _
    %233 = vsyncpa [#allocation3], 1
    %234 = vsyncpa [#allocation6], 1
    %235 = vsyncpa [#allocation9], 1
    %236 = vsyncpa [#allocation4], 1

</llo_original>
